<compile_context>
chip_gen: v6e
topology: v6e:2x2x1
jax: 0.10.0
libtpu: 0.0.40
codegen_flags: <defaults>
</compile_context>

<pallas_src>
import functools

import jax
import jax.numpy as jnp
from jax.experimental import pallas as pl
from jax.experimental.pallas import tpu as pltpu

_LANE = 128


def _round_up(v, m):
    return ((v + m - 1) // m) * m


def _pad2d(a, rows, cols, fill=0.0):
    """Pad a 2-D array up to [rows, cols] with `fill` (zeros by default)."""
    out = jnp.full((rows, cols), fill, dtype=jnp.float32)
    return out.at[: a.shape[0], : a.shape[1]].set(a.astype(jnp.float32))


# ---------------------------------------------------------------- fused kernel

def _graphsage_fused_kernel(adj_ref, x_ref,
                            w1l_ref, w1r_ref, b1_ref,
                            bn_g_ref, bn_b_ref, bn_m_ref, bn_v_ref,
                            w2l_ref, w2r_ref, b2_ref,
                            o_ref):
    adj = adj_ref[...]                                   # [N, N] row-normalized adjacency
    x = x_ref[...]                                       # [N, F_in_p]

    # ---- SAGEConv 1: lin_l(mean_neighbors) + bias + lin_r(x) ----
    agg = jnp.dot(adj, x, preferred_element_type=jnp.float32)                   # [N, F_in_p]
    h = (jnp.dot(agg, w1l_ref[...], preferred_element_type=jnp.float32)
         + b1_ref[...]
         + jnp.dot(x, w1r_ref[...], preferred_element_type=jnp.float32))        # [N, H_p]

    # ---- BatchNorm1d (eval, running stats) + Dropout(identity) + ReLU ----
    inv = jax.lax.rsqrt(bn_v_ref[...] + 1e-5)
    h = (h - bn_m_ref[...]) * inv * bn_g_ref[...] + bn_b_ref[...]
    h = jnp.maximum(h, 0.0)

    # ---- SAGEConv 2 ----
    agg2 = jnp.dot(adj, h, preferred_element_type=jnp.float32)                  # [N, H_p]
    o_ref[...] = (jnp.dot(agg2, w2l_ref[...], preferred_element_type=jnp.float32)
                  + b2_ref[...]
                  + jnp.dot(h, w2r_ref[...], preferred_element_type=jnp.float32))


# ---------------------------------------------------------------- wrapper

@functools.partial(jax.jit, static_argnames=("hid_dim", "out_dim"))
def graphsage_forward(x, edge_index, params, *, hid_dim, out_dim):
    n, f_in = x.shape
    src, dst = edge_index[0], edge_index[1]

    # Dense mean-aggregation operator: adj[i, j] = 1/deg(i) if edge j->i else 0.
    adj = jnp.zeros((n, n), jnp.float32).at[dst, src].set(1.0)
    deg = jnp.sum(adj, axis=1, keepdims=True)
    adj = adj / jnp.maximum(deg, 1.0)

    # Pad every feature (lane) dimension to a multiple of 128 -> lane-dense tiles/outputs.
    f_in_p = _round_up(f_in, _LANE)
    hid_p = _round_up(hid_dim, _LANE)
    out_p = _round_up(out_dim, _LANE)

    xp = _pad2d(x, n, f_in_p)
    w1l = _pad2d(params["W1_l"], f_in_p, hid_p)
    w1r = _pad2d(params["W1_r"], f_in_p, hid_p)
    b1 = _pad2d(params["b1"][None, :], 1, hid_p)
    bn_g = _pad2d(params["bn_g"][None, :], 1, hid_p)
    bn_b = _pad2d(params["bn_b"][None, :], 1, hid_p)
    bn_m = _pad2d(params["bn_m"][None, :], 1, hid_p)
    bn_v = _pad2d(params["bn_v"][None, :], 1, hid_p, fill=1.0)   # pad var with 1.0 (rsqrt-safe)
    w2l = _pad2d(params["W2_l"], hid_p, out_p)
    w2r = _pad2d(params["W2_r"], hid_p, out_p)
    b2 = _pad2d(params["b2"][None, :], 1, out_p)

    full = lambda shape: pl.BlockSpec(shape, lambda i: (0, 0))

    out = pl.pallas_call(
        _graphsage_fused_kernel,
        grid=(1,),
        out_shape=jax.ShapeDtypeStruct((n, out_p), jnp.float32),
        in_specs=[
            full((n, n)),            # adj (row-normalized)
            full((n, f_in_p)),       # x
            full((f_in_p, hid_p)),   # W1_l (neighbor path)
            full((f_in_p, hid_p)),   # W1_r (root path)
            full((1, hid_p)),        # b1
            full((1, hid_p)),        # bn gamma
            full((1, hid_p)),        # bn beta
            full((1, hid_p)),        # bn running mean
            full((1, hid_p)),        # bn running var
            full((hid_p, out_p)),    # W2_l
            full((hid_p, out_p)),    # W2_r
            full((1, out_p)),        # b2
        ],
        out_specs=full((n, out_p)),
        compiler_params=pltpu.CompilerParams(dimension_semantics=("arbitrary",)),
    )(adj, xp, w1l, w1r, b1, bn_g, bn_b, bn_m, bn_v, w2l, w2r, b2)

    return out[:, :out_dim]


# ---------------------------------------------------------------- pure-JAX reference

def _reference_forward(x, edge_index, params):
    n = x.shape[0]
    src, dst = edge_index[0], edge_index[1]
    adj = jnp.zeros((n, n), jnp.float32).at[dst, src].set(1.0)
    adj = adj / jnp.maximum(jnp.sum(adj, axis=1, keepdims=True), 1.0)
    h = (adj @ x) @ params["W1_l"] + params["b1"] + x @ params["W1_r"]
    h = (h - params["bn_m"]) * jax.lax.rsqrt(params["bn_v"] + 1e-5) * params["bn_g"] + params["bn_b"]
    h = jnp.maximum(h, 0.0)
    return (adj @ h) @ params["W2_l"] + params["b2"] + h @ params["W2_r"]


# ---------------------------------------------------------------- driver

if __name__ == "__main__":
    # config assumed: HID_DIM = 32, NUM_LAYERS = 2, out_dim = 2
    IN_DIM, HID_DIM, OUT_DIM = 16, 32, 2
    N = 16  # nodes

    key = jax.random.PRNGKey(0)
    keys = jax.random.split(key, 11)

    # node features [N, IN_DIM]
    x = jax.random.normal(keys[0], (N, IN_DIM), dtype=jnp.float32)

    # deterministic, duplicate-free edge list: i -> (i+1) % N and i -> (i+3) % N
    src = jnp.concatenate([jnp.arange(N), jnp.arange(N)]).astype(jnp.int32)
    dst = jnp.concatenate([(jnp.arange(N) + 1) % N, (jnp.arange(N) + 3) % N]).astype(jnp.int32)
    edge_index = jnp.stack([src, dst])  # [2, E], row0 = source, row1 = target (PyG convention)

    params = {
        # SAGEConv1: lin_l (neighbor path, carries the bias) and lin_r (root path, no bias),
        # stored as [in, out] so the kernel computes x @ W directly.
        "W1_l": 0.3 * jax.random.normal(keys[1], (IN_DIM, HID_DIM), dtype=jnp.float32),
        "W1_r": 0.3 * jax.random.normal(keys[2], (IN_DIM, HID_DIM), dtype=jnp.float32),
        "b1":   0.1 * jax.random.normal(keys[3], (HID_DIM,), dtype=jnp.float32),
        # BatchNorm1d (eval-mode running statistics)
        "bn_g": 1.0 + 0.1 * jax.random.normal(keys[4], (HID_DIM,), dtype=jnp.float32),
        "bn_b": 0.1 * jax.random.normal(keys[5], (HID_DIM,), dtype=jnp.float32),
        "bn_m": 0.05 * jax.random.normal(keys[6], (HID_DIM,), dtype=jnp.float32),
        "bn_v": 1.0 + 0.1 * jax.random.uniform(keys[7], (HID_DIM,), dtype=jnp.float32),
        # SAGEConv2
        "W2_l": 0.3 * jax.random.normal(keys[8], (HID_DIM, OUT_DIM), dtype=jnp.float32),
        "W2_r": 0.3 * jax.random.normal(keys[9], (HID_DIM, OUT_DIM), dtype=jnp.float32),
        "b2":   0.1 * jax.random.normal(keys[10], (OUT_DIM,), dtype=jnp.float32),
    }

    out = graphsage_forward(x, edge_index, params, hid_dim=HID_DIM, out_dim=OUT_DIM)
    jax.block_until_ready(out)

    ref = _reference_forward(x, edge_index, params)
    assert out.shape == (N, OUT_DIM)
    assert bool(jnp.all(jnp.isfinite(out)))
    assert bool(jnp.allclose(out, ref, atol=1e-4, rtol=1e-4)), "mismatch vs pure-JAX reference"
    print("KERNEL_OK")
</pallas_src>

<mosaic_0001>
module attributes {stable_mosaic.version = 11 : i64} {
  func.func @_graphsage_fused_kernel(%arg0: i32, %arg1: memref<16x16xf32, #tpu.memory_space<vmem>>, %arg2: memref<16x128xf32, #tpu.memory_space<vmem>>, %arg3: memref<128x128xf32, #tpu.memory_space<vmem>>, %arg4: memref<128x128xf32, #tpu.memory_space<vmem>>, %arg5: memref<1x128xf32, #tpu.memory_space<vmem>>, %arg6: memref<1x128xf32, #tpu.memory_space<vmem>>, %arg7: memref<1x128xf32, #tpu.memory_space<vmem>>, %arg8: memref<1x128xf32, #tpu.memory_space<vmem>>, %arg9: memref<1x128xf32, #tpu.memory_space<vmem>>, %arg10: memref<128x128xf32, #tpu.memory_space<vmem>>, %arg11: memref<128x128xf32, #tpu.memory_space<vmem>>, %arg12: memref<1x128xf32, #tpu.memory_space<vmem>>, %arg13: memref<16x128xf32, #tpu.memory_space<vmem>>) attributes {dimension_semantics = [#tpu.dimension_semantics<arbitrary>], iteration_bounds = array<i64: 1>, scalar_prefetch = 0 : i64, scratch_operands = 0 : i64, tpu.core_type = #tpu.core_type<tc>, window_params = [{pipeline_mode = #tpu.pipeline_mode<synchronous>, transform_indices = @transform_0, window_bounds = array<i64: 16, 16>}, {pipeline_mode = #tpu.pipeline_mode<synchronous>, transform_indices = @transform_1, window_bounds = array<i64: 16, 128>}, {pipeline_mode = #tpu.pipeline_mode<synchronous>, transform_indices = @transform_2, window_bounds = array<i64: 128, 128>}, {pipeline_mode = #tpu.pipeline_mode<synchronous>, transform_indices = @transform_3, window_bounds = array<i64: 128, 128>}, {pipeline_mode = #tpu.pipeline_mode<synchronous>, transform_indices = @transform_4, window_bounds = array<i64: 1, 128>}, {pipeline_mode = #tpu.pipeline_mode<synchronous>, transform_indices = @transform_5, window_bounds = array<i64: 1, 128>}, {pipeline_mode = #tpu.pipeline_mode<synchronous>, transform_indices = @transform_6, window_bounds = array<i64: 1, 128>}, {pipeline_mode = #tpu.pipeline_mode<synchronous>, transform_indices = @transform_7, window_bounds = array<i64: 1, 128>}, {pipeline_mode = #tpu.pipeline_mode<synchronous>, transform_indices = @transform_8, window_bounds = array<i64: 1, 128>}, {pipeline_mode = #tpu.pipeline_mode<synchronous>, transform_indices = @transform_9, window_bounds = array<i64: 128, 128>}, {pipeline_mode = #tpu.pipeline_mode<synchronous>, transform_indices = @transform_10, window_bounds = array<i64: 128, 128>}, {pipeline_mode = #tpu.pipeline_mode<synchronous>, transform_indices = @transform_11, window_bounds = array<i64: 1, 128>}, {pipeline_mode = #tpu.pipeline_mode<synchronous>, transform_indices = @transform_12, window_bounds = array<i64: 16, 128>}]} {
    %c0 = arith.constant 0 : index
    %c0_0 = arith.constant 0 : index
    %0 = vector.load %arg1[%c0, %c0_0] : memref<16x16xf32, #tpu.memory_space<vmem>>, vector<16x16xf32>
    %c0_1 = arith.constant 0 : index
    %c0_2 = arith.constant 0 : index
    %1 = vector.load %arg2[%c0_1, %c0_2] : memref<16x128xf32, #tpu.memory_space<vmem>>, vector<16x128xf32>
    %cst = arith.constant dense<0.000000e+00> : vector<16x128xf32>
    %2 = tpu.matmul %0, %1, %cst {dimension_numbers = #tpu.dot_dimension_numbers<[1], [0], [0], [1], [0, 0, 1, 1], [], []>} : vector<16x16xf32>, vector<16x128xf32>, vector<16x128xf32> -> vector<16x128xf32>
    %c0_3 = arith.constant 0 : index
    %c0_4 = arith.constant 0 : index
    %3 = vector.load %arg3[%c0_3, %c0_4] : memref<128x128xf32, #tpu.memory_space<vmem>>, vector<128x128xf32>
    %cst_5 = arith.constant dense<0.000000e+00> : vector<16x128xf32>
    %4 = tpu.matmul %2, %3, %cst_5 {dimension_numbers = #tpu.dot_dimension_numbers<[1], [0], [0], [1], [0, 0, 1, 1], [], []>} : vector<16x128xf32>, vector<128x128xf32>, vector<16x128xf32> -> vector<16x128xf32>
    %c0_6 = arith.constant 0 : index
    %c0_7 = arith.constant 0 : index
    %5 = vector.load %arg5[%c0_6, %c0_7] : memref<1x128xf32, #tpu.memory_space<vmem>>, vector<1x128xf32>
    %6 = vector.broadcast %5 : vector<1x128xf32> to vector<16x128xf32>
    %7 = arith.addf %4, %6 : vector<16x128xf32>
    %c0_8 = arith.constant 0 : index
    %c0_9 = arith.constant 0 : index
    %8 = vector.load %arg4[%c0_8, %c0_9] : memref<128x128xf32, #tpu.memory_space<vmem>>, vector<128x128xf32>
    %cst_10 = arith.constant dense<0.000000e+00> : vector<16x128xf32>
    %9 = tpu.matmul %1, %8, %cst_10 {dimension_numbers = #tpu.dot_dimension_numbers<[1], [0], [0], [1], [0, 0, 1, 1], [], []>} : vector<16x128xf32>, vector<128x128xf32>, vector<16x128xf32> -> vector<16x128xf32>
    %10 = arith.addf %7, %9 : vector<16x128xf32>
    %c0_11 = arith.constant 0 : index
    %c0_12 = arith.constant 0 : index
    %11 = vector.load %arg9[%c0_11, %c0_12] : memref<1x128xf32, #tpu.memory_space<vmem>>, vector<1x128xf32>
    %cst_13 = arith.constant 9.99999974E-6 : f32
    %12 = vector.broadcast %cst_13 : f32 to vector<1x128xf32>
    %13 = arith.addf %11, %12 : vector<1x128xf32>
    %14 = math.rsqrt %13 : vector<1x128xf32>
    %c0_14 = arith.constant 0 : index
    %c0_15 = arith.constant 0 : index
    %15 = vector.load %arg8[%c0_14, %c0_15] : memref<1x128xf32, #tpu.memory_space<vmem>>, vector<1x128xf32>
    %16 = vector.broadcast %15 : vector<1x128xf32> to vector<16x128xf32>
    %17 = arith.subf %10, %16 : vector<16x128xf32>
    %18 = vector.broadcast %14 : vector<1x128xf32> to vector<16x128xf32>
    %19 = arith.mulf %17, %18 : vector<16x128xf32>
    %c0_16 = arith.constant 0 : index
    %c0_17 = arith.constant 0 : index
    %20 = vector.load %arg6[%c0_16, %c0_17] : memref<1x128xf32, #tpu.memory_space<vmem>>, vector<1x128xf32>
    %21 = vector.broadcast %20 : vector<1x128xf32> to vector<16x128xf32>
    %22 = arith.mulf %19, %21 : vector<16x128xf32>
    %c0_18 = arith.constant 0 : index
    %c0_19 = arith.constant 0 : index
    %23 = vector.load %arg7[%c0_18, %c0_19] : memref<1x128xf32, #tpu.memory_space<vmem>>, vector<1x128xf32>
    %24 = vector.broadcast %23 : vector<1x128xf32> to vector<16x128xf32>
    %25 = arith.addf %22, %24 : vector<16x128xf32>
    %cst_20 = arith.constant 0.000000e+00 : f32
    %26 = vector.broadcast %cst_20 : f32 to vector<16x128xf32>
    %27 = arith.maximumf %25, %26 : vector<16x128xf32>
    %cst_21 = arith.constant dense<0.000000e+00> : vector<16x128xf32>
    %28 = tpu.matmul %0, %27, %cst_21 {dimension_numbers = #tpu.dot_dimension_numbers<[1], [0], [0], [1], [0, 0, 1, 1], [], []>} : vector<16x16xf32>, vector<16x128xf32>, vector<16x128xf32> -> vector<16x128xf32>
    %c0_22 = arith.constant 0 : index
    %c0_23 = arith.constant 0 : index
    %29 = vector.load %arg10[%c0_22, %c0_23] : memref<128x128xf32, #tpu.memory_space<vmem>>, vector<128x128xf32>
    %cst_24 = arith.constant dense<0.000000e+00> : vector<16x128xf32>
    %30 = tpu.matmul %28, %29, %cst_24 {dimension_numbers = #tpu.dot_dimension_numbers<[1], [0], [0], [1], [0, 0, 1, 1], [], []>} : vector<16x128xf32>, vector<128x128xf32>, vector<16x128xf32> -> vector<16x128xf32>
    %c0_25 = arith.constant 0 : index
    %c0_26 = arith.constant 0 : index
    %31 = vector.load %arg12[%c0_25, %c0_26] : memref<1x128xf32, #tpu.memory_space<vmem>>, vector<1x128xf32>
    %32 = vector.broadcast %31 : vector<1x128xf32> to vector<16x128xf32>
    %33 = arith.addf %30, %32 : vector<16x128xf32>
    %c0_27 = arith.constant 0 : index
    %c0_28 = arith.constant 0 : index
    %34 = vector.load %arg11[%c0_27, %c0_28] : memref<128x128xf32, #tpu.memory_space<vmem>>, vector<128x128xf32>
    %cst_29 = arith.constant dense<0.000000e+00> : vector<16x128xf32>
    %35 = tpu.matmul %27, %34, %cst_29 {dimension_numbers = #tpu.dot_dimension_numbers<[1], [0], [0], [1], [0, 0, 1, 1], [], []>} : vector<16x128xf32>, vector<128x128xf32>, vector<16x128xf32> -> vector<16x128xf32>
    %36 = arith.addf %33, %35 : vector<16x128xf32>
    %c0_30 = arith.constant 0 : index
    %c0_31 = arith.constant 0 : index
    %37 = vector.load %arg13[%c0_30, %c0_31] : memref<16x128xf32, #tpu.memory_space<vmem>>, vector<16x128xf32>
    tpu.vector_store %arg13[%c0_30, %c0_31], %36 {strides = array<i32>} : memref<16x128xf32, #tpu.memory_space<vmem>>, vector<16x128xf32>,
    return
  }
  func.func @transform_0(%arg0: i32) -> (i32, i32) {
    %c0_i32 = arith.constant 0 : i32
    %c0_i32_0 = arith.constant 0 : i32
    %c0_i32_1 = arith.constant 0 : i32
    return %c0_i32, %c0_i32_0 : i32, i32
  }
  func.func @transform_1(%arg0: i32) -> (i32, i32) {
    %c0_i32 = arith.constant 0 : i32
    %c0_i32_0 = arith.constant 0 : i32
    %c0_i32_1 = arith.constant 0 : i32
    return %c0_i32, %c0_i32_0 : i32, i32
  }
  func.func @transform_2(%arg0: i32) -> (i32, i32) {
    %c0_i32 = arith.constant 0 : i32
    %c0_i32_0 = arith.constant 0 : i32
    %c0_i32_1 = arith.constant 0 : i32
    return %c0_i32, %c0_i32_0 : i32, i32
  }
  func.func @transform_3(%arg0: i32) -> (i32, i32) {
    %c0_i32 = arith.constant 0 : i32
    %c0_i32_0 = arith.constant 0 : i32
    %c0_i32_1 = arith.constant 0 : i32
    return %c0_i32, %c0_i32_0 : i32, i32
  }
  func.func @transform_4(%arg0: i32) -> (i32, i32) {
    %c0_i32 = arith.constant 0 : i32
    %c0_i32_0 = arith.constant 0 : i32
    %c0_i32_1 = arith.constant 0 : i32
    return %c0_i32, %c0_i32_0 : i32, i32
  }
  func.func @transform_5(%arg0: i32) -> (i32, i32) {
    %c0_i32 = arith.constant 0 : i32
    %c0_i32_0 = arith.constant 0 : i32
    %c0_i32_1 = arith.constant 0 : i32
    return %c0_i32, %c0_i32_0 : i32, i32
  }
  func.func @transform_6(%arg0: i32) -> (i32, i32) {
    %c0_i32 = arith.constant 0 : i32
    %c0_i32_0 = arith.constant 0 : i32
    %c0_i32_1 = arith.constant 0 : i32
    return %c0_i32, %c0_i32_0 : i32, i32
  }
  func.func @transform_7(%arg0: i32) -> (i32, i32) {
    %c0_i32 = arith.constant 0 : i32
    %c0_i32_0 = arith.constant 0 : i32
    %c0_i32_1 = arith.constant 0 : i32
    return %c0_i32, %c0_i32_0 : i32, i32
  }
  func.func @transform_8(%arg0: i32) -> (i32, i32) {
    %c0_i32 = arith.constant 0 : i32
    %c0_i32_0 = arith.constant 0 : i32
    %c0_i32_1 = arith.constant 0 : i32
    return %c0_i32, %c0_i32_0 : i32, i32
  }
  func.func @transform_9(%arg0: i32) -> (i32, i32) {
    %c0_i32 = arith.constant 0 : i32
    %c0_i32_0 = arith.constant 0 : i32
    %c0_i32_1 = arith.constant 0 : i32
    return %c0_i32, %c0_i32_0 : i32, i32
  }
  func.func @transform_10(%arg0: i32) -> (i32, i32) {
    %c0_i32 = arith.constant 0 : i32
    %c0_i32_0 = arith.constant 0 : i32
    %c0_i32_1 = arith.constant 0 : i32
    return %c0_i32, %c0_i32_0 : i32, i32
  }
  func.func @transform_11(%arg0: i32) -> (i32, i32) {
    %c0_i32 = arith.constant 0 : i32
    %c0_i32_0 = arith.constant 0 : i32
    %c0_i32_1 = arith.constant 0 : i32
    return %c0_i32, %c0_i32_0 : i32, i32
  }
  func.func @transform_12(%arg0: i32) -> (i32, i32) {
    %c0_i32 = arith.constant 0 : i32
    %c0_i32_0 = arith.constant 0 : i32
    %c0_i32_1 = arith.constant 0 : i32
    return %c0_i32, %c0_i32_0 : i32, i32
  }
}

</mosaic_0001>

<llo_original>
// kernel: graphsage_forward.1
$region0: #{graphsage_forward.1}
  #allocation0 [shape = 'u32[]', space=smem, size = 0x4, offset = 0x4, fixed_abs, tag = 'smem constant byte address 0x4 - core index']
  #allocation1 [shape = 'u32[144,128]{1,0:T(1,128)}', space=vmem, size = 0x12000, scoped, tag = 'internal scratch']
  %s0 = inlined_call_operand.vmem [shape: f32[16,16], index: 0, kind: input, shape index: {}]
  %s1 = inlined_call_operand.vmem [shape: f32[16,128], index: 1, kind: input, shape index: {}]
  %s2 = inlined_call_operand.vmem [shape: f32[128,128], index: 2, kind: input, shape index: {}]
  %s3 = inlined_call_operand.vmem [shape: f32[128,128], index: 3, kind: input, shape index: {}]
  %s4 = inlined_call_operand.vmem [shape: f32[1,128], index: 4, kind: input, shape index: {}]
  %s5 = inlined_call_operand.vmem [shape: f32[1,128], index: 5, kind: input, shape index: {}]
  %s6 = inlined_call_operand.vmem [shape: f32[1,128], index: 6, kind: input, shape index: {}]
  %s7 = inlined_call_operand.vmem [shape: f32[1,128], index: 7, kind: input, shape index: {}]
  %s8 = inlined_call_operand.vmem [shape: f32[1,128], index: 8, kind: input, shape index: {}]
  %s9 = inlined_call_operand.vmem [shape: f32[128,128], index: 9, kind: input, shape index: {}]
  %s10 = inlined_call_operand.vmem [shape: f32[128,128], index: 10, kind: input, shape index: {}]
  %s11 = inlined_call_operand.vmem [shape: f32[1,128], index: 11, kind: input, shape index: {}]
  %s12 = inlined_call_operand.vmem [shape: f32[16,128], index: 12, kind: output, shape index: {}]
  %s13 = sld [smem:[#allocation0]]
  $region58: #{graphsage_forward.1} parent=0
    _
  %s15 = ssub.s32 1, %s13
  %s16 = scalar_select 0, %s15, %s13
  // Predicated region
  $region2: #{graphsage_forward.1} parent=0 // pred_check
    _
  $region3: #{graphsage_forward.1} parent=0 // pred_check_branch
    %18 = sbr.rel (0) target = $region5
  $region4: #{graphsage_forward.1} parent=0 // pred_region
    _
  $region5: #{graphsage_forward.1} parent=0 // pred_fallthru
    _
  // Predicated region
  $region6: #{graphsage_forward.1} parent=0 // pred_check
    _
  $region7: #{graphsage_forward.1} parent=0 // pred_check_branch
    %20 = sbr.rel (0) target = $region9
  $region8: #{graphsage_forward.1} parent=0 // pred_region
    _
  $region9: #{graphsage_forward.1} parent=0 // pred_fallthru
    _
  // Predicated region
  $region10: #{graphsage_forward.1} parent=0 // pred_check
    _
  $region11: #{graphsage_forward.1} parent=0 // pred_check_branch
    %22 = sbr.rel (0) target = $region13
  $region12: #{graphsage_forward.1} parent=0 // pred_region
    _
  $region13: #{graphsage_forward.1} parent=0 // pred_fallthru
    _
  // Predicated region
  $region14: #{graphsage_forward.1} parent=0 // pred_check
    _
  $region15: #{graphsage_forward.1} parent=0 // pred_check_branch
    %24 = sbr.rel (0) target = $region17
  $region16: #{graphsage_forward.1} parent=0 // pred_region
    _
  $region17: #{graphsage_forward.1} parent=0 // pred_fallthru
    _
  // Predicated region
  $region18: #{graphsage_forward.1} parent=0 // pred_check
    _
  $region19: #{graphsage_forward.1} parent=0 // pred_check_branch
    %26 = sbr.rel (0) target = $region21
  $region20: #{graphsage_forward.1} parent=0 // pred_region
    _
  $region21: #{graphsage_forward.1} parent=0 // pred_fallthru
    _
  // Predicated region
  $region22: #{graphsage_forward.1} parent=0 // pred_check
    _
  $region23: #{graphsage_forward.1} parent=0 // pred_check_branch
    %28 = sbr.rel (0) target = $region25
  $region24: #{graphsage_forward.1} parent=0 // pred_region
    _
  $region25: #{graphsage_forward.1} parent=0 // pred_fallthru
    _
  // Predicated region
  $region26: #{graphsage_forward.1} parent=0 // pred_check
    _
  $region27: #{graphsage_forward.1} parent=0 // pred_check_branch
    %30 = sbr.rel (0) target = $region29
  $region28: #{graphsage_forward.1} parent=0 // pred_region
    _
  $region29: #{graphsage_forward.1} parent=0 // pred_fallthru
    _
  // Predicated region
  $region30: #{graphsage_forward.1} parent=0 // pred_check
    _
  $region31: #{graphsage_forward.1} parent=0 // pred_check_branch
    %32 = sbr.rel (0) target = $region33
  $region32: #{graphsage_forward.1} parent=0 // pred_region
    _
  $region33: #{graphsage_forward.1} parent=0 // pred_fallthru
    _
  // Predicated region
  $region34: #{graphsage_forward.1} parent=0 // pred_check
    _
  $region35: #{graphsage_forward.1} parent=0 // pred_check_branch
    %34 = sbr.rel (0) target = $region37
  $region36: #{graphsage_forward.1} parent=0 // pred_region
    _
  $region37: #{graphsage_forward.1} parent=0 // pred_fallthru
    _
  // Predicated region
  $region38: #{graphsage_forward.1} parent=0 // pred_check
    _
  $region39: #{graphsage_forward.1} parent=0 // pred_check_branch
    %36 = sbr.rel (0) target = $region41
  $region40: #{graphsage_forward.1} parent=0 // pred_region
    _
  $region41: #{graphsage_forward.1} parent=0 // pred_fallthru
    _
  // Predicated region
  $region42: #{graphsage_forward.1} parent=0 // pred_check
    _
  $region43: #{graphsage_forward.1} parent=0 // pred_check_branch
    %38 = sbr.rel (0) target = $region45
  $region44: #{graphsage_forward.1} parent=0 // pred_region
    _
  $region45: #{graphsage_forward.1} parent=0 // pred_fallthru
    _
  // Predicated region
  $region46: #{graphsage_forward.1} parent=0 // pred_check
    _
  $region47: #{graphsage_forward.1} parent=0 // pred_check_branch
    %40 = sbr.rel (0) target = $region49
  $region48: #{graphsage_forward.1} parent=0 // pred_region
    _
  $region49: #{graphsage_forward.1} parent=0 // pred_fallthru
    _
  %v41 = vld [vmem:[%s0] sm:$0xff]
  %v42 = vld [vmem:[%s0 + $0x8] sm:$0xff]
  %v43 = vld [vmem:[%s1] sm:$0xff]
  %v44 = vld [vmem:[%s1 + $0x8] sm:$0xff]
  %vm45 = vcmask 130048
  %v47 = vsel %vm45, %v41, 0
  %v50 = vsel %vm45, %v42, 0
  %52 = vmatprep.subr.mxu0 0.0
  %53 = vmatpush1.msra.mxu0 0.0
  %54 = vmatprep.subr.mxu0 0.0
  %55 = vmatpush1.msra.mxu0 0.0
  %56 = vmatprep.subr.mxu0 0.0
  %57 = vmatpush1.msra.mxu0 0.0
  %58 = vmatprep.subr.mxu0 0.0
  %59 = vmatpush1.msra.mxu0 0.0
  %60 = vmatprep.subr.mxu0 0.0
  %61 = vmatpush1.msra.mxu0 0.0
  %62 = vmatprep.subr.mxu0 0.0
  %63 = vmatpush1.msra.mxu0 0.0
  %64 = vmatprep.subr.mxu0 0.0
  %65 = vmatpush1.msra.mxu0 0.0
  %66 = vmatprep.subr.mxu0 0.0
  %67 = vmatpush1.msra.mxu0 0.0
  %68 = vmatprep.subr.mxu0 0.0
  %69 = vmatpush1.msra.mxu0 0.0
  %70 = vmatprep.subr.mxu0 0.0
  %71 = vmatpush1.msra.mxu0 0.0
  %72 = vmatprep.subr.mxu0 0.0
  %73 = vmatpush1.msra.mxu0 0.0
  %74 = vmatprep.subr.mxu0 0.0
  %75 = vmatpush1.msra.mxu0 0.0
  %76 = vmatprep.subr.mxu0 0.0
  %77 = vmatpush1.msra.mxu0 0.0
  %78 = vmatprep.subr.mxu0 0.0
  %79 = vmatpush1.msra.mxu0 0.0
  %80 = vmatprep.subr.mxu0 0.0
  %81 = vmatpush1.msra.mxu0 %v44
  %82 = vmatprep.subr.mxu0 0.0
  %83 = vmatpush1.msra.mxu0 %v43
  %84 = vmatprep.subr.mxu0 0.0
  %85 = vmatpush2.msra.mxu0 0.0
  %86 = vmatprep.subr.mxu0 0.0
  %87 = vmatpush2.msra.mxu0 0.0
  %88 = vmatprep.subr.mxu0 0.0
  %89 = vmatpush2.msra.mxu0 0.0
  %90 = vmatprep.subr.mxu0 0.0
  %91 = vmatpush2.msra.mxu0 0.0
  %92 = vmatprep.subr.mxu0 0.0
  %93 = vmatpush2.msra.mxu0 0.0
  %94 = vmatprep.subr.mxu0 0.0
  %95 = vmatpush2.msra.mxu0 0.0
  %96 = vmatprep.subr.mxu0 0.0
  %97 = vmatpush2.msra.mxu0 0.0
  %98 = vmatprep.subr.mxu0 0.0
  %99 = vmatpush2.msra.mxu0 0.0
  %100 = vmatprep.subr.mxu0 0.0
  %101 = vmatpush2.msra.mxu0 0.0
  %102 = vmatprep.subr.mxu0 0.0
  %103 = vmatpush2.msra.mxu0 0.0
  %104 = vmatprep.subr.mxu0 0.0
  %105 = vmatpush2.msra.mxu0 0.0
  %106 = vmatprep.subr.mxu0 0.0
  %107 = vmatpush2.msra.mxu0 0.0
  %108 = vmatprep.subr.mxu0 0.0
  %109 = vmatpush2.msra.mxu0 0.0
  %110 = vmatprep.subr.mxu0 0.0
  %111 = vmatpush2.msra.mxu0 0.0
  %112 = vmatprep.subr.mxu0 0.0
  %113 = vmatpush2.msra.mxu0 0.0
  %114 = vmatprep.subr.mxu0 0.0
  %115 = vmatpush2.msra.mxu0 0.0
  %116 = vmatprep.mubr.f32.mxu0 0.0
  %117 = vmatmul.mubr.f32.gmra.mxu0 %v47
  %v118 = vpop.f32.mrf.mxu0
  %v119 = vadd.f32 0.0, %v118
  %v120 = vpop.f32.mrf.mxu0
  %121 = vmatprep.mubr.f32.mxu0 0.0
  %122 = vmatmul.mubr.f32.gmra.mxu0 %v50
  %v123 = vpop.f32.mrf.mxu0
  %v124 = vadd.f32 0.0, %v123
  %v125 = vpop.f32.mrf.mxu0
  %126 = vdwg.mxu0
  %v127 = vld [vmem:[%s2] sm:$0xff]
  %v128 = vld [vmem:[%s2 + $0x8] sm:$0xff]
  %v129 = vld [vmem:[%s2 + $0x10] sm:$0xff]
  %v130 = vld [vmem:[%s2 + $0x18] sm:$0xff]
  %v131 = vld [vmem:[%s2 + $0x20] sm:$0xff]
  %v132 = vld [vmem:[%s2 + $0x28] sm:$0xff]
  %v133 = vld [vmem:[%s2 + $0x30] sm:$0xff]
  %v134 = vld [vmem:[%s2 + $0x38] sm:$0xff]
  %v135 = vld [vmem:[%s2 + $0x40] sm:$0xff]
  %v136 = vld [vmem:[%s2 + $0x48] sm:$0xff]
  %v137 = vld [vmem:[%s2 + $0x50] sm:$0xff]
  %v138 = vld [vmem:[%s2 + $0x58] sm:$0xff]
  %v139 = vld [vmem:[%s2 + $0x60] sm:$0xff]
  %v140 = vld [vmem:[%s2 + $0x68] sm:$0xff]
  %v141 = vld [vmem:[%s2 + $0x70] sm:$0xff]
  %v142 = vld [vmem:[%s2 + $0x78] sm:$0xff]
  %v143 = vld [vmem:[%s4] sm:$0x1]
  %v145 = vlaneseq
  %v146 = vshrl.u32 %v145, 7
  %v147 = vsub.s32 0, %v146
  %v148 = vrot.slane %v143, %v147
  %150 = vmatprep.subr.mxu0 0.0
  %151 = vmatpush1.msra.mxu0 %v142
  %152 = vmatprep.subr.mxu0 0.0
  %153 = vmatpush1.msra.mxu0 %v141
  %154 = vmatprep.subr.mxu0 0.0
  %155 = vmatpush1.msra.mxu0 %v140
  %156 = vmatprep.subr.mxu0 0.0
  %157 = vmatpush1.msra.mxu0 %v139
  %158 = vmatprep.subr.mxu0 0.0
  %159 = vmatpush1.msra.mxu0 %v138
  %160 = vmatprep.subr.mxu0 0.0
  %161 = vmatpush1.msra.mxu0 %v137
  %162 = vmatprep.subr.mxu0 0.0
  %163 = vmatpush1.msra.mxu0 %v136
  %164 = vmatprep.subr.mxu0 0.0
  %165 = vmatpush1.msra.mxu0 %v135
  %166 = vmatprep.subr.mxu0 0.0
  %167 = vmatpush1.msra.mxu0 %v134
  %168 = vmatprep.subr.mxu0 0.0
  %169 = vmatpush1.msra.mxu0 %v133
  %170 = vmatprep.subr.mxu0 0.0
  %171 = vmatpush1.msra.mxu0 %v132
  %172 = vmatprep.subr.mxu0 0.0
  %173 = vmatpush1.msra.mxu0 %v131
  %174 = vmatprep.subr.mxu0 0.0
  %175 = vmatpush1.msra.mxu0 %v130
  %176 = vmatprep.subr.mxu0 0.0
  %177 = vmatpush1.msra.mxu0 %v129
  %178 = vmatprep.subr.mxu0 0.0
  %179 = vmatpush1.msra.mxu0 %v128
  %180 = vmatprep.subr.mxu0 0.0
  %181 = vmatpush1.msra.mxu0 %v127
  %182 = vmatprep.subr.mxu0 0.0
  %183 = vmatpush2.msra.mxu0 0.0
  %184 = vmatprep.subr.mxu0 0.0
  %185 = vmatpush2.msra.mxu0 0.0
  %186 = vmatprep.subr.mxu0 0.0
  %187 = vmatpush2.msra.mxu0 0.0
  %188 = vmatprep.subr.mxu0 0.0
  %189 = vmatpush2.msra.mxu0 0.0
  %190 = vmatprep.subr.mxu0 0.0
  %191 = vmatpush2.msra.mxu0 0.0
  %192 = vmatprep.subr.mxu0 0.0
  %193 = vmatpush2.msra.mxu0 0.0
  %194 = vmatprep.subr.mxu0 0.0
  %195 = vmatpush2.msra.mxu0 0.0
  %196 = vmatprep.subr.mxu0 0.0
  %197 = vmatpush2.msra.mxu0 0.0
  %198 = vmatprep.subr.mxu0 0.0
  %199 = vmatpush2.msra.mxu0 0.0
  %200 = vmatprep.subr.mxu0 0.0
  %201 = vmatpush2.msra.mxu0 0.0
  %202 = vmatprep.subr.mxu0 0.0
  %203 = vmatpush2.msra.mxu0 0.0
  %204 = vmatprep.subr.mxu0 0.0
  %205 = vmatpush2.msra.mxu0 0.0
  %206 = vmatprep.subr.mxu0 0.0
  %207 = vmatpush2.msra.mxu0 0.0
  %208 = vmatprep.subr.mxu0 0.0
  %209 = vmatpush2.msra.mxu0 0.0
  %210 = vmatprep.subr.mxu0 0.0
  %211 = vmatpush2.msra.mxu0 0.0
  %212 = vmatprep.subr.mxu0 0.0
  %213 = vmatpush2.msra.mxu0 0.0
  %214 = vmatprep.mubr.f32.mxu0 0.0
  %215 = vmatmul.mubr.f32.gmra.mxu0 %v119
  %v216 = vpop.f32.mrf.mxu0
  %v217 = vadd.f32 %v148, %v216
  %v218 = vpop.f32.mrf.mxu0
  %219 = vmatprep.mubr.f32.mxu0 0.0
  %220 = vmatmul.mubr.f32.gmra.mxu0 %v124
  %v221 = vpop.f32.mrf.mxu0
  %v222 = vadd.f32 %v148, %v221
  %v223 = vpop.f32.mrf.mxu0
  %224 = vdwg.mxu0
  %v225 = vld [vmem:[%s3] sm:$0xff]
  %v226 = vld [vmem:[%s3 + $0x8] sm:$0xff]
  %v227 = vld [vmem:[%s3 + $0x10] sm:$0xff]
  %v228 = vld [vmem:[%s3 + $0x18] sm:$0xff]
  %v229 = vld [vmem:[%s3 + $0x20] sm:$0xff]
  %v230 = vld [vmem:[%s3 + $0x28] sm:$0xff]
  %v231 = vld [vmem:[%s3 + $0x30] sm:$0xff]
  %v232 = vld [vmem:[%s3 + $0x38] sm:$0xff]
  %v233 = vld [vmem:[%s3 + $0x40] sm:$0xff]
  %v234 = vld [vmem:[%s3 + $0x48] sm:$0xff]
  %v235 = vld [vmem:[%s3 + $0x50] sm:$0xff]
  %v236 = vld [vmem:[%s3 + $0x58] sm:$0xff]
  %v237 = vld [vmem:[%s3 + $0x60] sm:$0xff]
  %v238 = vld [vmem:[%s3 + $0x68] sm:$0xff]
  %v239 = vld [vmem:[%s3 + $0x70] sm:$0xff]
  %v240 = vld [vmem:[%s3 + $0x78] sm:$0xff]
  %241 = vmatprep.subr.mxu0 0.0
  %242 = vmatpush1.msra.mxu0 %v240
  %243 = vmatprep.subr.mxu0 0.0
  %244 = vmatpush1.msra.mxu0 %v239
  %245 = vmatprep.subr.mxu0 0.0
  %246 = vmatpush1.msra.mxu0 %v238
  %247 = vmatprep.subr.mxu0 0.0
  %248 = vmatpush1.msra.mxu0 %v237
  %249 = vmatprep.subr.mxu0 0.0
  %250 = vmatpush1.msra.mxu0 %v236
  %251 = vmatprep.subr.mxu0 0.0
  %252 = vmatpush1.msra.mxu0 %v235
  %253 = vmatprep.subr.mxu0 0.0
  %254 = vmatpush1.msra.mxu0 %v234
  %255 = vmatprep.subr.mxu0 0.0
  %256 = vmatpush1.msra.mxu0 %v233
  %257 = vmatprep.subr.mxu0 0.0
  %258 = vmatpush1.msra.mxu0 %v232
  %259 = vmatprep.subr.mxu0 0.0
  %260 = vmatpush1.msra.mxu0 %v231
  %261 = vmatprep.subr.mxu0 0.0
  %262 = vmatpush1.msra.mxu0 %v230
  %263 = vmatprep.subr.mxu0 0.0
  %264 = vmatpush1.msra.mxu0 %v229
  %265 = vmatprep.subr.mxu0 0.0
  %266 = vmatpush1.msra.mxu0 %v228
  %267 = vmatprep.subr.mxu0 0.0
  %268 = vmatpush1.msra.mxu0 %v227
  %269 = vmatprep.subr.mxu0 0.0
  %270 = vmatpush1.msra.mxu0 %v226
  %271 = vmatprep.subr.mxu0 0.0
  %272 = vmatpush1.msra.mxu0 %v225
  %273 = vmatprep.subr.mxu0 0.0
  %274 = vmatpush2.msra.mxu0 0.0
  %275 = vmatprep.subr.mxu0 0.0
  %276 = vmatpush2.msra.mxu0 0.0
  %277 = vmatprep.subr.mxu0 0.0
  %278 = vmatpush2.msra.mxu0 0.0
  %279 = vmatprep.subr.mxu0 0.0
  %280 = vmatpush2.msra.mxu0 0.0
  %281 = vmatprep.subr.mxu0 0.0
  %282 = vmatpush2.msra.mxu0 0.0
  %283 = vmatprep.subr.mxu0 0.0
  %284 = vmatpush2.msra.mxu0 0.0
  %285 = vmatprep.subr.mxu0 0.0
  %286 = vmatpush2.msra.mxu0 0.0
  %287 = vmatprep.subr.mxu0 0.0
  %288 = vmatpush2.msra.mxu0 0.0
  %289 = vmatprep.subr.mxu0 0.0
  %290 = vmatpush2.msra.mxu0 0.0
  %291 = vmatprep.subr.mxu0 0.0
  %292 = vmatpush2.msra.mxu0 0.0
  %293 = vmatprep.subr.mxu0 0.0
  %294 = vmatpush2.msra.mxu0 0.0
  %295 = vmatprep.subr.mxu0 0.0
  %296 = vmatpush2.msra.mxu0 0.0
  %297 = vmatprep.subr.mxu0 0.0
  %298 = vmatpush2.msra.mxu0 0.0
  %299 = vmatprep.subr.mxu0 0.0
  %300 = vmatpush2.msra.mxu0 0.0
  %301 = vmatprep.subr.mxu0 0.0
  %302 = vmatpush2.msra.mxu0 0.0
  %303 = vmatprep.subr.mxu0 0.0
  %304 = vmatpush2.msra.mxu0 0.0
  %305 = vmatprep.mubr.f32.mxu0 0.0
  %306 = vmatmul.mubr.f32.gmra.mxu0 %v43
  %v307 = vpop.f32.mrf.mxu0
  %v308 = vadd.f32 0.0, %v307
  %v309 = vpop.f32.mrf.mxu0
  %310 = vmatprep.mubr.f32.mxu0 0.0
  %311 = vmatmul.mubr.f32.gmra.mxu0 %v44
  %v312 = vpop.f32.mrf.mxu0
  %v313 = vadd.f32 0.0, %v312
  %v314 = vpop.f32.mrf.mxu0
  %315 = vdwg.mxu0
  %v316 = vadd.f32 %v217, %v308
  %v317 = vadd.f32 %v222, %v313
  %v318 = vld [vmem:[%s8] sm:$0x1]
  %v319 = vadd.f32 %v318, 1e-05
  %v320 = vrsqrt.pop %v319
  %v321 = vld [vmem:[%s7] sm:$0x1]
  %v323 = vlaneseq
  %v324 = vshrl.u32 %v323, 7
  %v325 = vsub.s32 0, %v324
  %v326 = vrot.slane %v321, %v325
  %v328 = vsub.f32 %v316, %v326
  %v329 = vsub.f32 %v317, %v326
  %v331 = vlaneseq
  %v332 = vshrl.u32 %v331, 7
  %v333 = vsub.s32 0, %v332
  %v334 = vrot.slane %v320, %v333
  %v336 = vmul.f32 %v328, %v334
  %v337 = vmul.f32 %v329, %v334
  %v338 = vld [vmem:[%s5] sm:$0x1]
  %v340 = vlaneseq
  %v341 = vshrl.u32 %v340, 7
  %v342 = vsub.s32 0, %v341
  %v343 = vrot.slane %v338, %v342
  %v345 = vmul.f32 %v336, %v343
  %v346 = vmul.f32 %v337, %v343
  %v347 = vld [vmem:[%s6] sm:$0x1]
  %v349 = vlaneseq
  %v350 = vshrl.u32 %v349, 7
  %v351 = vsub.s32 0, %v350
  %v352 = vrot.slane %v347, %v351
  %v354 = vadd.f32 %v345, %v352
  %v355 = vadd.f32 %v346, %v352
  %v356 = vmax.f32 %v354, 0.0
  %v357 = vmax.f32 %v355, 0.0
  %358 = vmatprep.subr.mxu0 0.0
  %359 = vmatpush1.msra.mxu0 0.0
  %360 = vmatprep.subr.mxu0 0.0
  %361 = vmatpush1.msra.mxu0 0.0
  %362 = vmatprep.subr.mxu0 0.0
  %363 = vmatpush1.msra.mxu0 0.0
  %364 = vmatprep.subr.mxu0 0.0
  %365 = vmatpush1.msra.mxu0 0.0
  %366 = vmatprep.subr.mxu0 0.0
  %367 = vmatpush1.msra.mxu0 0.0
  %368 = vmatprep.subr.mxu0 0.0
  %369 = vmatpush1.msra.mxu0 0.0
  %370 = vmatprep.subr.mxu0 0.0
  %371 = vmatpush1.msra.mxu0 0.0
  %372 = vmatprep.subr.mxu0 0.0
  %373 = vmatpush1.msra.mxu0 0.0
  %374 = vmatprep.subr.mxu0 0.0
  %375 = vmatpush1.msra.mxu0 0.0
  %376 = vmatprep.subr.mxu0 0.0
  %377 = vmatpush1.msra.mxu0 0.0
  %378 = vmatprep.subr.mxu0 0.0
  %379 = vmatpush1.msra.mxu0 0.0
  %380 = vmatprep.subr.mxu0 0.0
  %381 = vmatpush1.msra.mxu0 0.0
  %382 = vmatprep.subr.mxu0 0.0
  %383 = vmatpush1.msra.mxu0 0.0
  %384 = vmatprep.subr.mxu0 0.0
  %385 = vmatpush1.msra.mxu0 0.0
  %386 = vmatprep.subr.mxu0 0.0
  %387 = vmatpush1.msra.mxu0 %v357
  %388 = vmatprep.subr.mxu0 0.0
  %389 = vmatpush1.msra.mxu0 %v356
  %390 = vmatprep.subr.mxu0 0.0
  %391 = vmatpush2.msra.mxu0 0.0
  %392 = vmatprep.subr.mxu0 0.0
  %393 = vmatpush2.msra.mxu0 0.0
  %394 = vmatprep.subr.mxu0 0.0
  %395 = vmatpush2.msra.mxu0 0.0
  %396 = vmatprep.subr.mxu0 0.0
  %397 = vmatpush2.msra.mxu0 0.0
  %398 = vmatprep.subr.mxu0 0.0
  %399 = vmatpush2.msra.mxu0 0.0
  %400 = vmatprep.subr.mxu0 0.0
  %401 = vmatpush2.msra.mxu0 0.0
  %402 = vmatprep.subr.mxu0 0.0
  %403 = vmatpush2.msra.mxu0 0.0
  %404 = vmatprep.subr.mxu0 0.0
  %405 = vmatpush2.msra.mxu0 0.0
  %406 = vmatprep.subr.mxu0 0.0
  %407 = vmatpush2.msra.mxu0 0.0
  %408 = vmatprep.subr.mxu0 0.0
  %409 = vmatpush2.msra.mxu0 0.0
  %410 = vmatprep.subr.mxu0 0.0
  %411 = vmatpush2.msra.mxu0 0.0
  %412 = vmatprep.subr.mxu0 0.0
  %413 = vmatpush2.msra.mxu0 0.0
  %414 = vmatprep.subr.mxu0 0.0
  %415 = vmatpush2.msra.mxu0 0.0
  %416 = vmatprep.subr.mxu0 0.0
  %417 = vmatpush2.msra.mxu0 0.0
  %418 = vmatprep.subr.mxu0 0.0
  %419 = vmatpush2.msra.mxu0 0.0
  %420 = vmatprep.subr.mxu0 0.0
  %421 = vmatpush2.msra.mxu0 0.0
  %422 = vmatprep.mubr.f32.mxu0 0.0
  %423 = vmatmul.mubr.f32.gmra.mxu0 %v47
  %v424 = vpop.f32.mrf.mxu0
  %v425 = vadd.f32 0.0, %v424
  %v426 = vpop.f32.mrf.mxu0
  %427 = vmatprep.mubr.f32.mxu0 0.0
  %428 = vmatmul.mubr.f32.gmra.mxu0 %v50
  %v429 = vpop.f32.mrf.mxu0
  %v430 = vadd.f32 0.0, %v429
  %v431 = vpop.f32.mrf.mxu0
  %432 = vdwg.mxu0
  %v433 = vld [vmem:[%s9] sm:$0xff]
  %v434 = vld [vmem:[%s9 + $0x8] sm:$0xff]
  %v435 = vld [vmem:[%s9 + $0x10] sm:$0xff]
  %v436 = vld [vmem:[%s9 + $0x18] sm:$0xff]
  %v437 = vld [vmem:[%s9 + $0x20] sm:$0xff]
  %v438 = vld [vmem:[%s9 + $0x28] sm:$0xff]
  %v439 = vld [vmem:[%s9 + $0x30] sm:$0xff]
  %v440 = vld [vmem:[%s9 + $0x38] sm:$0xff]
  %v441 = vld [vmem:[%s9 + $0x40] sm:$0xff]
  %v442 = vld [vmem:[%s9 + $0x48] sm:$0xff]
  %v443 = vld [vmem:[%s9 + $0x50] sm:$0xff]
  %v444 = vld [vmem:[%s9 + $0x58] sm:$0xff]
  %v445 = vld [vmem:[%s9 + $0x60] sm:$0xff]
  %v446 = vld [vmem:[%s9 + $0x68] sm:$0xff]
  %v447 = vld [vmem:[%s9 + $0x70] sm:$0xff]
  %v448 = vld [vmem:[%s9 + $0x78] sm:$0xff]
  %v449 = vld [vmem:[%s11] sm:$0x1]
  %v451 = vlaneseq
  %v452 = vshrl.u32 %v451, 7
  %v453 = vsub.s32 0, %v452
  %v454 = vrot.slane %v449, %v453
  %456 = vmatprep.subr.mxu0 0.0
  %457 = vmatpush1.msra.mxu0 %v448
  %458 = vmatprep.subr.mxu0 0.0
  %459 = vmatpush1.msra.mxu0 %v447
  %460 = vmatprep.subr.mxu0 0.0
  %461 = vmatpush1.msra.mxu0 %v446
  %462 = vmatprep.subr.mxu0 0.0
  %463 = vmatpush1.msra.mxu0 %v445
  %464 = vmatprep.subr.mxu0 0.0
  %465 = vmatpush1.msra.mxu0 %v444
  %466 = vmatprep.subr.mxu0 0.0
  %467 = vmatpush1.msra.mxu0 %v443
  %468 = vmatprep.subr.mxu0 0.0
  %469 = vmatpush1.msra.mxu0 %v442
  %470 = vmatprep.subr.mxu0 0.0
  %471 = vmatpush1.msra.mxu0 %v441
  %472 = vmatprep.subr.mxu0 0.0
  %473 = vmatpush1.msra.mxu0 %v440
  %474 = vmatprep.subr.mxu0 0.0
  %475 = vmatpush1.msra.mxu0 %v439
  %476 = vmatprep.subr.mxu0 0.0
  %477 = vmatpush1.msra.mxu0 %v438
  %478 = vmatprep.subr.mxu0 0.0
  %479 = vmatpush1.msra.mxu0 %v437
  %480 = vmatprep.subr.mxu0 0.0
  %481 = vmatpush1.msra.mxu0 %v436
  %482 = vmatprep.subr.mxu0 0.0
  %483 = vmatpush1.msra.mxu0 %v435
  %484 = vmatprep.subr.mxu0 0.0
  %485 = vmatpush1.msra.mxu0 %v434
  %486 = vmatprep.subr.mxu0 0.0
  %487 = vmatpush1.msra.mxu0 %v433
  %488 = vmatprep.subr.mxu0 0.0
  %489 = vmatpush2.msra.mxu0 0.0
  %490 = vmatprep.subr.mxu0 0.0
  %491 = vmatpush2.msra.mxu0 0.0
  %492 = vmatprep.subr.mxu0 0.0
  %493 = vmatpush2.msra.mxu0 0.0
  %494 = vmatprep.subr.mxu0 0.0
  %495 = vmatpush2.msra.mxu0 0.0
  %496 = vmatprep.subr.mxu0 0.0
  %497 = vmatpush2.msra.mxu0 0.0
  %498 = vmatprep.subr.mxu0 0.0
  %499 = vmatpush2.msra.mxu0 0.0
  %500 = vmatprep.subr.mxu0 0.0
  %501 = vmatpush2.msra.mxu0 0.0
  %502 = vmatprep.subr.mxu0 0.0
  %503 = vmatpush2.msra.mxu0 0.0
  %504 = vmatprep.subr.mxu0 0.0
  %505 = vmatpush2.msra.mxu0 0.0
  %506 = vmatprep.subr.mxu0 0.0
  %507 = vmatpush2.msra.mxu0 0.0
  %508 = vmatprep.subr.mxu0 0.0
  %509 = vmatpush2.msra.mxu0 0.0
  %510 = vmatprep.subr.mxu0 0.0
  %511 = vmatpush2.msra.mxu0 0.0
  %512 = vmatprep.subr.mxu0 0.0
  %513 = vmatpush2.msra.mxu0 0.0
  %514 = vmatprep.subr.mxu0 0.0
  %515 = vmatpush2.msra.mxu0 0.0
  %516 = vmatprep.subr.mxu0 0.0
  %517 = vmatpush2.msra.mxu0 0.0
  %518 = vmatprep.subr.mxu0 0.0
  %519 = vmatpush2.msra.mxu0 0.0
  %520 = vmatprep.mubr.f32.mxu0 0.0
  %521 = vmatmul.mubr.f32.gmra.mxu0 %v425
  %v522 = vpop.f32.mrf.mxu0
  %v523 = vadd.f32 %v454, %v522
  %v524 = vpop.f32.mrf.mxu0
  %525 = vmatprep.mubr.f32.mxu0 0.0
  %526 = vmatmul.mubr.f32.gmra.mxu0 %v430
  %v527 = vpop.f32.mrf.mxu0
  %v528 = vadd.f32 %v454, %v527
  %v529 = vpop.f32.mrf.mxu0
  %530 = vdwg.mxu0
  %v531 = vld [vmem:[%s10] sm:$0xff]
  %v532 = vld [vmem:[%s10 + $0x8] sm:$0xff]
  %v533 = vld [vmem:[%s10 + $0x10] sm:$0xff]
  %v534 = vld [vmem:[%s10 + $0x18] sm:$0xff]
  %v535 = vld [vmem:[%s10 + $0x20] sm:$0xff]
  %v536 = vld [vmem:[%s10 + $0x28] sm:$0xff]
  %v537 = vld [vmem:[%s10 + $0x30] sm:$0xff]
  %v538 = vld [vmem:[%s10 + $0x38] sm:$0xff]
  %v539 = vld [vmem:[%s10 + $0x40] sm:$0xff]
  %v540 = vld [vmem:[%s10 + $0x48] sm:$0xff]
  %v541 = vld [vmem:[%s10 + $0x50] sm:$0xff]
  %v542 = vld [vmem:[%s10 + $0x58] sm:$0xff]
  %v543 = vld [vmem:[%s10 + $0x60] sm:$0xff]
  %v544 = vld [vmem:[%s10 + $0x68] sm:$0xff]
  %v545 = vld [vmem:[%s10 + $0x70] sm:$0xff]
  %v546 = vld [vmem:[%s10 + $0x78] sm:$0xff]
  %547 = vmatprep.subr.mxu0 0.0
  %548 = vmatpush1.msra.mxu0 %v546
  %549 = vmatprep.subr.mxu0 0.0
  %550 = vmatpush1.msra.mxu0 %v545
  %551 = vmatprep.subr.mxu0 0.0
  %552 = vmatpush1.msra.mxu0 %v544
  %553 = vmatprep.subr.mxu0 0.0
  %554 = vmatpush1.msra.mxu0 %v543
  %555 = vmatprep.subr.mxu0 0.0
  %556 = vmatpush1.msra.mxu0 %v542
  %557 = vmatprep.subr.mxu0 0.0
  %558 = vmatpush1.msra.mxu0 %v541
  %559 = vmatprep.subr.mxu0 0.0
  %560 = vmatpush1.msra.mxu0 %v540
  %561 = vmatprep.subr.mxu0 0.0
  %562 = vmatpush1.msra.mxu0 %v539
  %563 = vmatprep.subr.mxu0 0.0
  %564 = vmatpush1.msra.mxu0 %v538
  %565 = vmatprep.subr.mxu0 0.0
  %566 = vmatpush1.msra.mxu0 %v537
  %567 = vmatprep.subr.mxu0 0.0
  %568 = vmatpush1.msra.mxu0 %v536
  %569 = vmatprep.subr.mxu0 0.0
  %570 = vmatpush1.msra.mxu0 %v535
  %571 = vmatprep.subr.mxu0 0.0
  %572 = vmatpush1.msra.mxu0 %v534
  %573 = vmatprep.subr.mxu0 0.0
  %574 = vmatpush1.msra.mxu0 %v533
  %575 = vmatprep.subr.mxu0 0.0
  %576 = vmatpush1.msra.mxu0 %v532
  %577 = vmatprep.subr.mxu0 0.0
  %578 = vmatpush1.msra.mxu0 %v531
  %579 = vmatprep.subr.mxu0 0.0
  %580 = vmatpush2.msra.mxu0 0.0
  %581 = vmatprep.subr.mxu0 0.0
  %582 = vmatpush2.msra.mxu0 0.0
  %583 = vmatprep.subr.mxu0 0.0
  %584 = vmatpush2.msra.mxu0 0.0
  %585 = vmatprep.subr.mxu0 0.0
  %586 = vmatpush2.msra.mxu0 0.0
  %587 = vmatprep.subr.mxu0 0.0
  %588 = vmatpush2.msra.mxu0 0.0
  %589 = vmatprep.subr.mxu0 0.0
  %590 = vmatpush2.msra.mxu0 0.0
  %591 = vmatprep.subr.mxu0 0.0
  %592 = vmatpush2.msra.mxu0 0.0
  %593 = vmatprep.subr.mxu0 0.0
  %594 = vmatpush2.msra.mxu0 0.0
  %595 = vmatprep.subr.mxu0 0.0
  %596 = vmatpush2.msra.mxu0 0.0
  %597 = vmatprep.subr.mxu0 0.0
  %598 = vmatpush2.msra.mxu0 0.0
  %599 = vmatprep.subr.mxu0 0.0
  %600 = vmatpush2.msra.mxu0 0.0
  %601 = vmatprep.subr.mxu0 0.0
  %602 = vmatpush2.msra.mxu0 0.0
  %603 = vmatprep.subr.mxu0 0.0
  %604 = vmatpush2.msra.mxu0 0.0
  %605 = vmatprep.subr.mxu0 0.0
  %606 = vmatpush2.msra.mxu0 0.0
  %607 = vmatprep.subr.mxu0 0.0
  %608 = vmatpush2.msra.mxu0 0.0
  %609 = vmatprep.subr.mxu0 0.0
  %610 = vmatpush2.msra.mxu0 0.0
  %611 = vmatprep.mubr.f32.mxu0 0.0
  %612 = vmatmul.mubr.f32.gmra.mxu0 %v356
  %v613 = vpop.f32.mrf.mxu0
  %v614 = vadd.f32 0.0, %v613
  %v615 = vpop.f32.mrf.mxu0
  %616 = vmatprep.mubr.f32.mxu0 0.0
  %617 = vmatmul.mubr.f32.gmra.mxu0 %v357
  %v618 = vpop.f32.mrf.mxu0
  %v619 = vadd.f32 0.0, %v618
  %v620 = vpop.f32.mrf.mxu0
  %621 = vdwg.mxu0
  %v622 = vadd.f32 %v523, %v614
  %v623 = vadd.f32 %v528, %v619
  %624 = vst [vmem:[%s12] sm:$0xff] %v622
  %625 = vst [vmem:[%s12 + $0x8] sm:$0xff] %v623
  // Predicated region
  $region50: #{graphsage_forward.1} parent=0 // pred_check
    _
  $region51: #{graphsage_forward.1} parent=0 // pred_check_branch
    %627 = sbr.rel (0) target = $region53
  $region52: #{graphsage_forward.1} parent=0 // pred_region
    _
  $region53: #{graphsage_forward.1} parent=0 // pred_fallthru
    _
  // Predicated region
  $region54: #{graphsage_forward.1} parent=0 // pred_check
    _
  $region55: #{graphsage_forward.1} parent=0 // pred_check_branch
    %629 = sbr.rel (0) target = $region57
  $region56: #{graphsage_forward.1} parent=0 // pred_region
    _
  $region57: #{graphsage_forward.1} parent=0 // pred_fallthru
    _

</llo_original>
